<compile_context>
chip_gen: v7x
topology: tpu7x:2x2x1
jax: 0.10.0
libtpu: 0.0.40
codegen_flags: <defaults>
</compile_context>

<pallas_src>
import functools

import jax
import jax.numpy as jnp
from jax.experimental import pallas as pl
from jax.experimental.pallas import tpu as pltpu

_MiB = 1024 * 1024


def _rmsnorm_kernel(x_ref, w_ref, o_ref, *, eps, h_chunk):
    """RMSNorm over the last (lane) axis of a (block_rows, hidden) tile.

    When h_chunk < hidden, the sum-of-squares and normalize/scale passes stream
    over hidden sub-chunks (VMEM re-reads are cheap: 3 vld slots/cycle) so at
    most a (rows, h_chunk) fp32 temporary is live at a time.
    """
    rows, hidden = x_ref.shape
    n_chunks = hidden // h_chunk

    if n_chunks <= 1:
        x = x_ref[...].astype(jnp.float32)                      # .to(float32)
        variance = jnp.mean(x * x, axis=-1, keepdims=True)      # mean over hidden
        inv = jax.lax.rsqrt(variance + eps)
        # PyTorch: weight.to(input_dtype) * hidden_states.to(input_dtype)
        o_ref[...] = w_ref[...] * (x * inv).astype(o_ref.dtype)
    else:
        # Pass 1: streamed fp32 sum of squares.
        ssq = jnp.zeros((rows, 1), jnp.float32)
        for c in range(n_chunks):
            lo = c * h_chunk
            xc = x_ref[:, lo:lo + h_chunk].astype(jnp.float32)
            ssq = ssq + jnp.sum(xc * xc, axis=-1, keepdims=True)
        inv = jax.lax.rsqrt(ssq * (1.0 / hidden) + eps)
        # Pass 2: streamed normalize + weight multiply, per-chunk writeback.
        for c in range(n_chunks):
            lo = c * h_chunk
            xc = x_ref[:, lo:lo + h_chunk].astype(jnp.float32)
            o_ref[:, lo:lo + h_chunk] = (
                w_ref[:, lo:lo + h_chunk] * (xc * inv).astype(o_ref.dtype))


def _vmem_capacity_bytes():
    try:
        return int(pltpu.get_tpu_info().vmem_capacity_bytes)
    except Exception:
        # Conservative fallback: assume the smallest per-core VMEM (v7x, 64 MiB).
        return 64 * _MiB


def _pick_hidden_chunk(hidden, requested):
    if requested is not None and hidden % requested == 0:
        return requested
    if hidden <= 2048 or hidden % 128 != 0:
        return hidden
    # Largest multiple-of-128 divisor of hidden that is <= 2048.
    for c in range(2048, 127, -128):
        if hidden % c == 0:
            return c
    return hidden


def llama_rmsnorm(x, weight, eps=1e-6, *, block_rows=1024,
                  vmem_budget_bytes=None, hidden_chunk=None):
    """x: (..., hidden); weight: (hidden,). Returns same shape/dtype as x."""
    orig_shape = x.shape
    hidden = orig_shape[-1]
    rows = 1
    for d in orig_shape[:-1]:
        rows *= d

    x2 = x.reshape(rows, hidden)
    # Pre-cast the weight ONCE (outside the grid loop) to the input dtype, so
    # the kernel's multiply is the input_dtype-domain multiply.
    w2 = weight.astype(x.dtype).reshape(1, hidden)

    itemsize = x2.dtype.itemsize
    # Sublane packing: 8 rows/vreg for f32, 16 for bf16, 32 for int8/fp8.
    row_align = 8 * max(1, 4 // itemsize)

    h_chunk = _pick_hidden_chunk(hidden, hidden_chunk)

    # --- Generation-aware VMEM budget / limit --------------------------------
    phys_vmem = _vmem_capacity_bytes()
    is_small_vmem = phys_vmem <= 96 * _MiB          # v7x: 64 MiB per TensorCore
    if vmem_budget_bytes is None:
        vmem_budget_bytes = 36 * _MiB if is_small_vmem else 56 * _MiB
    vmem_limit = 56 * _MiB if is_small_vmem else 96 * _MiB
    vmem_limit = max(vmem_limit, int(vmem_budget_bytes * 1.5))
    vmem_limit = max(32 * _MiB, min(vmem_limit, phys_vmem - 8 * _MiB))

    # Per-row VMEM cost: double-buffered in + out tiles in the input dtype
    # (2 arrays x 2 buffers) plus live fp32 temporaries bounded by h_chunk.
    per_row_bytes = hidden * 4 * itemsize + h_chunk * 8

    # Robustness: even one row-aligned block must fit on-chip.
    min_block_bytes = row_align * per_row_bytes + 2 * hidden * itemsize
    if min_block_bytes > phys_vmem - 8 * _MiB:
        # TODO(synk): split hidden onto a second ("arbitrary") grid axis with a
        # partial-sum accumulator for hidden sizes that exceed one row tile.
        raise ValueError(
            f"hidden={hidden} too large for a single row tile in "
            f"{phys_vmem // _MiB} MiB of VMEM")
    vmem_limit = max(vmem_limit,
                     min(phys_vmem - 8 * _MiB, int(min_block_bytes * 1.5)))

    max_rows = max(row_align,
                   (vmem_budget_bytes // per_row_bytes) // row_align * row_align)

    br = max(row_align, (block_rows // row_align) * row_align)
    br = min(br, max_rows)
    rows_aligned = ((rows + row_align - 1) // row_align) * row_align
    br = min(br, rows_aligned)

    # v7x megacore: keep >= 2 grid blocks so both TensorCores get work.
    if is_small_vmem and rows_aligned >= 2 * row_align:
        half = max(row_align, (rows_aligned // 2) // row_align * row_align)
        br = min(br, half)

    grid = (pl.cdiv(rows, br),)

    cost = pl.CostEstimate(
        flops=5 * rows * hidden,                 # square, reduce, mean, norm, scale
        transcendentals=rows,                    # rsqrt per row
        bytes_accessed=2 * rows * hidden * itemsize + hidden * itemsize,
    )

    out = pl.pallas_call(
        functools.partial(_rmsnorm_kernel, eps=eps, h_chunk=h_chunk),
        out_shape=jax.ShapeDtypeStruct((rows, hidden), x.dtype),
        grid_spec=pltpu.PrefetchScalarGridSpec(
            num_scalar_prefetch=0,
            grid=grid,
            in_specs=[
                pl.BlockSpec((br, hidden), lambda i: (i, 0)),   # activation tile
                pl.BlockSpec((1, hidden), lambda i: (0, 0)),    # weight (resident)
            ],
            out_specs=pl.BlockSpec((br, hidden), lambda i: (i, 0)),
        ),
        compiler_params=pltpu.CompilerParams(
            dimension_semantics=("parallel",),   # shard row loop across TCs (v7x)
            vmem_limit_bytes=int(vmem_limit),
        ),
        cost_estimate=cost,
    )(x2, w2)
    return out.reshape(orig_shape)


def _reference_rmsnorm(x, weight, eps=1e-6):
    input_dtype = x.dtype
    xf = x.astype(jnp.float32)
    variance = jnp.mean(xf * xf, axis=-1, keepdims=True)
    xf = xf * jax.lax.rsqrt(variance + eps)
    return weight.astype(input_dtype) * xf.astype(input_dtype)


if __name__ == "__main__":
    key = jax.random.PRNGKey(0)
    kx, kw, kx2 = jax.random.split(key, 3)

    # Small but lane-aligned Llama-like shape.
    batch, seq, hidden = 2, 8, 256
    x = jax.random.normal(kx, (batch, seq, hidden), dtype=jnp.float32).astype(jnp.bfloat16)
    weight = 1.0 + 0.1 * jax.random.normal(kw, (hidden,), dtype=jnp.float32)

    out = jax.block_until_ready(llama_rmsnorm(x, weight, eps=1e-6))
    ref = _reference_rmsnorm(x, weight, eps=1e-6)
    assert out.shape == x.shape and out.dtype == x.dtype
    assert jnp.allclose(out.astype(jnp.float32), ref.astype(jnp.float32),
                        atol=2e-2, rtol=2e-2)

    # Ragged row count (rows = 15, not a multiple of the row tile) exercises
    # the pl.cdiv grid + masked boundary block path.
    x2 = jax.random.normal(kx2, (3, 5, hidden), dtype=jnp.float32).astype(jnp.bfloat16)
    out2 = jax.block_until_ready(llama_rmsnorm(x2, weight, eps=1e-6))
    ref2 = _reference_rmsnorm(x2, weight, eps=1e-6)
    assert out2.shape == x2.shape and out2.dtype == x2.dtype
    assert jnp.allclose(out2.astype(jnp.float32), ref2.astype(jnp.float32),
                        atol=2e-2, rtol=2e-2)

    # Explicitly exercise the hidden-chunked (streamed sum-of-squares) path.
    out3 = jax.block_until_ready(
        llama_rmsnorm(x, weight, eps=1e-6, hidden_chunk=128, block_rows=16))
    assert jnp.allclose(out3.astype(jnp.float32), ref.astype(jnp.float32),
                        atol=2e-2, rtol=2e-2)

    print("KERNEL_OK")
</pallas_src>

<mosaic_0001>
module attributes {stable_mosaic.version = 11 : i64} {
  func.func @_rmsnorm_kernel(%arg0: i32, %arg1: memref<16x256xbf16, #tpu.memory_space<vmem>>, %arg2: memref<1x256xbf16, #tpu.memory_space<vmem>>, %arg3: memref<16x256xbf16, #tpu.memory_space<vmem>>) attributes {dimension_semantics = [#tpu.dimension_semantics<parallel>], iteration_bounds = array<i64: 1>, scalar_prefetch = 0 : i64, scratch_operands = 0 : i64, tpu.core_type = #tpu.core_type<tc>, window_params = [{transform_indices = @transform_0, window_bounds = array<i64: 16, 256>}, {pipeline_mode = #tpu.pipeline_mode<synchronous>, transform_indices = @transform_1, window_bounds = array<i64: 1, 256>}, {transform_indices = @transform_2, window_bounds = array<i64: 16, 256>}]} {
    %c0 = arith.constant 0 : index
    %c0_0 = arith.constant 0 : index
    %0 = vector.load %arg1[%c0, %c0_0] : memref<16x256xbf16, #tpu.memory_space<vmem>>, vector<16x256xbf16>
    %1 = arith.extf %0 : vector<16x256xbf16> to vector<16x256xf32>
    %2 = arith.mulf %1, %1 : vector<16x256xf32>
    %cst = arith.constant dense<0.000000e+00> : vector<16xf32>
    %3 = vector.multi_reduction <add>, %2, %cst [1] : vector<16x256xf32> to vector<16xf32>
    %4 = vector.shape_cast %3 : vector<16xf32> to vector<16x1xf32>
    %cst_1 = arith.constant 2.560000e+02 : f32
    %5 = vector.broadcast %cst_1 : f32 to vector<16x1xf32>
    %6 = arith.divf %4, %5 : vector<16x1xf32>
    %cst_2 = arith.constant 9.99999997E-7 : f32
    %7 = vector.broadcast %cst_2 : f32 to vector<16x1xf32>
    %8 = arith.addf %6, %7 : vector<16x1xf32>
    %9 = math.rsqrt %8 : vector<16x1xf32>
    %c0_3 = arith.constant 0 : index
    %c0_4 = arith.constant 0 : index
    %10 = vector.load %arg2[%c0_3, %c0_4] : memref<1x256xbf16, #tpu.memory_space<vmem>>, vector<1x256xbf16>
    %11 = vector.broadcast %9 : vector<16x1xf32> to vector<16x256xf32>
    %12 = arith.mulf %1, %11 : vector<16x256xf32>
    %13 = arith.truncf %12 : vector<16x256xf32> to vector<16x256xbf16>
    %14 = vector.broadcast %10 : vector<1x256xbf16> to vector<16x256xbf16>
    %15 = arith.mulf %14, %13 : vector<16x256xbf16>
    %c0_5 = arith.constant 0 : index
    %c0_6 = arith.constant 0 : index
    %16 = vector.load %arg3[%c0_5, %c0_6] : memref<16x256xbf16, #tpu.memory_space<vmem>>, vector<16x256xbf16>
    tpu.vector_store %arg3[%c0_5, %c0_6], %15 {strides = array<i32>} : memref<16x256xbf16, #tpu.memory_space<vmem>>, vector<16x256xbf16>,
    return
  }
  func.func @transform_0(%arg0: i32) -> (i32, i32) {
    %c0_i32 = arith.constant 0 : i32
    %c0_i32_0 = arith.constant 0 : i32
    return %arg0, %c0_i32 : i32, i32
  }
  func.func @transform_1(%arg0: i32) -> (i32, i32) {
    %c0_i32 = arith.constant 0 : i32
    %c0_i32_0 = arith.constant 0 : i32
    %c0_i32_1 = arith.constant 0 : i32
    return %c0_i32, %c0_i32_0 : i32, i32
  }
  func.func @transform_2(%arg0: i32) -> (i32, i32) {
    %c0_i32 = arith.constant 0 : i32
    %c0_i32_0 = arith.constant 0 : i32
    return %arg0, %c0_i32 : i32, i32
  }
}

</mosaic_0001>

<llo_original>
// kernel: tpu_custom_call.1
$region0: #{tpu_custom_call.1}
  #allocation0 [shape = 'u32[]', space=smem, size = 0x4, offset = 0x4, fixed_abs, tag = 'smem constant byte address 0x4 - core index']
  #allocation1 [shape = 'u32[144,128]{1,0:T(1,128)}', space=vmem, size = 0x12000, scoped, tag = 'internal scratch']
  %s0 = inlined_call_operand.hbm [shape: bf16[16,256], index: 0, kind: input, shape index: {}]
  %s1 = inlined_call_operand.vmem [shape: bf16[1,256], index: 1, kind: input, shape index: {}]
  %s2 = inlined_call_operand.hbm [shape: bf16[16,256], index: 2, kind: output, shape index: {}]
  %s3 = sld [smem:[#allocation0]]
  $region22: #{tpu_custom_call.1} parent=0
    _
  %s5 = ssub.s32 1, %s3
  %s6 = scalar_select 0, %s5, %s3
  $region1: #{tpu_custom_call.1} parent=0
    #allocation2 [shape = 'u8[8192]{0}', space=vmem, size = 0x2000, scoped, tag = 'input window, operand 0, single buffered']
    #allocation3 [shape = 's32[1]{0}', space=sflag, size = 0x4, scoped, tag = 'scoped memory for tpu_custom_call.1']
    #allocation4 [shape = 's32[1]{0}', space=sflag, size = 0x4, scoped, tag = 'scoped memory for tpu_custom_call.1']
    #allocation5 [shape = 'u8[8192]{0}', space=vmem, size = 0x2000, scoped, tag = 'output window, operand 0, single buffered']
    %7 = vsyncpa [#allocation3], 0
    %8 = vsyncpa [#allocation4], 0
    // Predicated region
    $region2: #{tpu_custom_call.1} parent=1 // pred_check
      _
    $region3: #{tpu_custom_call.1} parent=1 // pred_check_branch
      %10 = sbr.rel (0) target = $region5
    $region4: #{tpu_custom_call.1} parent=1 // pred_region
      %s12 = ssub.s32 256, 256
      %13 = vsyncadd [#allocation3], %s12
      %s14 = sshll.u32 [#allocation2], 4
      %s15 = int_to_ptr.vmem [resolvable:$true] %s14
      %20 = dma.hbm_to_vmem [thread:$0]  %s0, 256, %s15, [#allocation3], 128, 128, 8
    $region5: #{tpu_custom_call.1} parent=1 // pred_fallthru
      _
    // Predicated region
    $region6: #{tpu_custom_call.1} parent=1 // pred_check
      _
    $region7: #{tpu_custom_call.1} parent=1 // pred_check_branch
      %22 = sbr.rel (0) target = $region9
    $region8: #{tpu_custom_call.1} parent=1 // pred_region
      _
    $region9: #{tpu_custom_call.1} parent=1 // pred_fallthru
      _
    // Predicated region
    $region10: #{tpu_custom_call.1} parent=1 // pred_check
      _
    $region11: #{tpu_custom_call.1} parent=1 // pred_check_branch
      %24 = sbr.rel (0) target = $region13
    $region12: #{tpu_custom_call.1} parent=1 // pred_region
      %25 = dma.done [#allocation3], 256
    $region13: #{tpu_custom_call.1} parent=1 // pred_fallthru
      _
    %v26 = vld [vmem:[#allocation2] sm:$0xff]
    %v27 = vld [vmem:[#allocation2 + $0x8] sm:$0xff]
    %v28 = vunpack.c.l.bf16 %v26
    %v29 = vunpack.c.h.bf16 %v26
    %v30 = vunpack.c.l.bf16 %v27
    %v31 = vunpack.c.h.bf16 %v27
    %v32 = vmul.f32 %v28, %v28
    %v33 = vmul.f32 %v29, %v29
    %v34 = vmul.f32 %v30, %v30
    %v35 = vmul.f32 %v31, %v31
    %v36 = vadd.f32 %v32, %v33
    %37 = vadd.xlane.f32.xlu0 %v36
    %v38 = vpop.xlane.xlu0 %37
    %v39 = vadd.f32 %v34, %v35
    %40 = vadd.xlane.f32.xlu0 %v39
    %v41 = vpop.xlane.xlu0 %40
    %v42 = vrcp.pop 256.0
    %v43 = vmul.f32 %v38, %v42
    %v44 = vmul.f32 %v41, %v42
    %v45 = vadd.f32 %v43, 1e-06
    %v46 = vadd.f32 %v44, 1e-06
    %v47 = vrsqrt.pop %v45
    %v48 = vrsqrt.pop %v46
    %v49 = vld [vmem:[%s1] sm:$0x3]
    %v50 = vmul.f32 %v28, %v47
    %v51 = vmul.f32 %v29, %v47
    %v52 = vmul.f32 %v30, %v48
    %v53 = vmul.f32 %v31, %v48
    %v54 = vpack.c.bf16 %v52, %v50
    %v55 = vpack.c.bf16 %v53, %v51
    %v58 = vunpack.c.l.s4 1966171168
    %v59 = vunpack.c.0.s8 %v58
    %v60 = vlaneseq
    %v61 = vshrl.u32 %v60, 7
    %v62 = vsub.s32 %v59, %v61
    %v63 = vrot.slane %v49, %v62
    %v64 = vcombine.high %v63, %v63
    %v66 = vunpack.c.l.s4 1966171168
    %v67 = vunpack.c.0.s8 %v66
    %v68 = vlaneseq
    %v69 = vshrl.u32 %v68, 7
    %v70 = vsub.s32 %v67, %v69
    %v71 = vrot.slane %v63, %v70
    %v73 = vunpack.c.l.s4 1966171168
    %v74 = vunpack.c.0.s8 %v73
    %v75 = vlaneseq
    %v76 = vshrl.u32 %v75, 7
    %v77 = vsub.s32 %v74, %v76
    %v78 = vrot.slane %v64, %v77
    %v80 = vpack.i.b16 %v71, %v71
    %v82 = vlaneseq
    %v83 = vshrl.u32 %v82, 7
    %v84 = vsub.s32 0, %v83
    %v85 = vrot.slane %v80, %v84
    %v87 = vpack.i.b16 %v78, %v78
    %v89 = vlaneseq
    %v90 = vshrl.u32 %v89, 7
    %v91 = vsub.s32 0, %v90
    %v92 = vrot.slane %v87, %v91
    %v93 = vmul.bf16 %v85, %v54
    %v94 = vmul.bf16 %v92, %v55
    %v97 = vunpack.c.l.b16 %v93
    %v98 = vunpack.c.l.b16 %v94
    %v99 = vunpack.c.h.b16 %v93
    %v100 = vunpack.c.h.b16 %v94
    %v101 = vpack.c.b16 %v98, %v97
    %v102 = vpack.c.b16 %v100, %v99
    %105 = vst [vmem:[#allocation5] sm:$0xff] %v101
    %106 = vst [vmem:[#allocation5 + $0x8] sm:$0xff] %v102
    // Predicated region
    $region14: #{tpu_custom_call.1} parent=1 // pred_check
      _
    $region15: #{tpu_custom_call.1} parent=1 // pred_check_branch
      %108 = sbr.rel (0) target = $region17
    $region16: #{tpu_custom_call.1} parent=1 // pred_region
      %s110 = ssub.s32 256, 256
      %111 = vsyncadd [#allocation4], %s110
      %s112 = sshll.u32 [#allocation5], 4
      %s113 = int_to_ptr.vmem [resolvable:$true] %s112
      %118 = dma.vmem_to_hbm [thread:$0]  %s113, 256, %s2, [#allocation4], 128, 128, 8
    $region17: #{tpu_custom_call.1} parent=1 // pred_fallthru
      _
    // Predicated region
    $region18: #{tpu_custom_call.1} parent=1 // pred_check
      _
    $region19: #{tpu_custom_call.1} parent=1 // pred_check_branch
      %120 = sbr.rel (0) target = $region21
    $region20: #{tpu_custom_call.1} parent=1 // pred_region
      %121 = dma.done [#allocation4], 256
    $region21: #{tpu_custom_call.1} parent=1 // pred_fallthru
      _
    %122 = vsyncpa [#allocation3], 1
    %123 = vsyncpa [#allocation4], 1

</llo_original>
